<compile_context>
chip_gen: v5e
topology: v5e:2x2
jax: 0.10.0
libtpu: 0.0.40
codegen_flags: <defaults>
</compile_context>

<pallas_src>
import math

import jax
import jax.numpy as jnp
from jax.experimental import pallas as pl
from jax.experimental.pallas import tpu as pltpu


def _postgcn_kernel(x_ref, w_ref, att_ref, b2_ref, o_ref, sup_ref):
    # x_ref  : (B, N_pad, Fin)      bf16, full array, resident every step
    # w_ref  : (Fin, H_pad)         bf16
    # att_ref: (tm, N_pad)          bf16 row block of att
    # b2_ref : (1, B*H_pad)         f32 bias tiled across batch lane blocks
    # o_ref  : (tm, B*H_pad)        f32 lane-dense output row block
    # sup_ref: (N_pad, B*H_pad)     bf16 VMEM scratch (support, batch in lanes)
    B = x_ref.shape[0]
    H = w_ref.shape[1]

    @pl.when(pl.program_id(0) == 0)
    def _():
        # B is small & static -> unrolled per-batch MXU dots (no zero MACs).
        for b in range(B):
            sup_ref[:, b * H:(b + 1) * H] = jnp.dot(
                x_ref[b], w_ref[...],
                preferred_element_type=jnp.float32).astype(sup_ref.dtype)

    out = jnp.dot(att_ref[...], sup_ref[...], preferred_element_type=jnp.float32)
    o_ref[...] = out + b2_ref[...]


def _round_up(x, m):
    return (x + m - 1) // m * m


def postgcn_forward(x, params, *, row_tile=512):
    """x: (B, N, Fin) float32. params: {'weight': (Fin,H), 'att': (N,N), 'bias': (H,)}."""
    B, N, Fin = x.shape
    w, att, bias = params['weight'], params['att'], params['bias']
    H = w.shape[1]

    # --- padding guards: N -> multiple of 16 (bf16 sublanes), B*H -> multiple of 128 lanes.
    lane_mult = 128 // math.gcd(B, 128)
    H_pad = _round_up(H, lane_mult)                  # guarantees B*H_pad % 128 == 0
    if N <= row_tile:
        N_pad = _round_up(N, 16)
        tm = N_pad
    else:
        tm = row_tile                                # row_tile is a multiple of 16
        N_pad = _round_up(N, row_tile)

    # bf16 matmul operands (f32 accumulation inside the kernel); bias/output f32.
    x_b = x.astype(jnp.bfloat16)
    w_b = w.astype(jnp.bfloat16)
    att_b = att.astype(jnp.bfloat16)
    if N_pad != N:
        x_b = jnp.pad(x_b, ((0, 0), (0, N_pad - N), (0, 0)))
        att_b = jnp.pad(att_b, ((0, N_pad - N), (0, N_pad - N)))
    if H_pad != H:
        w_b = jnp.pad(w_b, ((0, 0), (0, H_pad - H)))
        bias = jnp.pad(bias, (0, H_pad - H))
    b2 = jnp.tile(bias.astype(jnp.float32).reshape(1, H_pad), (1, B))   # (1, B*H_pad)

    grid = (N_pad // tm,)

    # Useful FLOPs only (no padding / no block-diagonal over-count).
    flops = 2 * B * N * Fin * H + 2 * B * N * N * H
    bytes_accessed = (2 * (x_b.size + w_b.size + att_b.size)
                      + 4 * (b2.size + N_pad * B * H_pad))

    # VMEM budget from actual block sizes (x, w, b2 resident; att/out double-buffered
    # row blocks; bf16 support scratch) plus headroom for compiler temporaries.
    vmem_bytes = (2 * (B * N_pad * Fin * 2 + Fin * H_pad * 2 + tm * N_pad * 2
                       + B * H_pad * 4 + tm * B * H_pad * 4)
                  + N_pad * B * H_pad * 2)
    vmem_limit = max(4 * 1024 * 1024, min(64 * 1024 * 1024, vmem_bytes + (2 << 20)))

    out_t = pl.pallas_call(
        _postgcn_kernel,
        out_shape=jax.ShapeDtypeStruct((N_pad, B * H_pad), jnp.float32),
        grid_spec=pltpu.PrefetchScalarGridSpec(
            num_scalar_prefetch=0,
            grid=grid,
            in_specs=[
                pl.BlockSpec((B, N_pad, Fin), lambda i: (0, 0, 0)),   # x (full)
                pl.BlockSpec((Fin, H_pad), lambda i: (0, 0)),          # W (full)
                pl.BlockSpec((tm, N_pad), lambda i: (i, 0)),           # att row block
                pl.BlockSpec((1, B * H_pad), lambda i: (0, 0)),        # bias (full)
            ],
            out_specs=pl.BlockSpec((tm, B * H_pad), lambda i: (i, 0)),
            scratch_shapes=[pltpu.VMEM((N_pad, B * H_pad), jnp.bfloat16)],
        ),
        compiler_params=pltpu.CompilerParams(
            # "arbitrary": the support scratch is computed at step 0 and reused.
            dimension_semantics=("arbitrary",),
            vmem_limit_bytes=int(vmem_limit)),
        cost_estimate=pl.CostEstimate(
            flops=int(flops), transcendentals=0, bytes_accessed=int(bytes_accessed)),
    )(x_b, w_b, att_b, b2)

    # Back to the PyTorch (B, N, H) convention; drop padding.
    out = jnp.transpose(out_t[:N].reshape(N, B, H_pad), (1, 0, 2))
    return out[..., :H] if H_pad != H else out


def init_params(key, in_features, hidden_features, node_n):
    """Mirrors GraphConvolution.reset_parameters (uniform +-1/sqrt(out_features))."""
    stdv = 1.0 / math.sqrt(hidden_features)
    kw, ka, kb = jax.random.split(key, 3)
    u = lambda k, shape: jax.random.uniform(k, shape, jnp.float32, -stdv, stdv)
    return {
        'weight': u(kw, (in_features, hidden_features)),
        'att':    u(ka, (node_n, node_n)),
        'bias':   u(kb, (hidden_features,)),
    }


def postgcn_reference(x, params):
    """Pure-JAX f32 mirror of the PyTorch PostGCN.forward."""
    support = jnp.matmul(x, params['weight'])        # (B, N, H)
    output = jnp.matmul(params['att'], support)      # (B, N, H)
    return output + params['bias']


if __name__ == "__main__":
    B, N, Fin, H = 2, 48, 64, 64   # batch, node_n, input_feature, hidden_feature
    key = jax.random.PRNGKey(0)
    kx, kp = jax.random.split(key)
    x = jax.random.normal(kx, (B, N, Fin), jnp.float32)
    params = init_params(kp, in_features=Fin, hidden_features=H, node_n=N)

    fwd = jax.jit(postgcn_forward)
    out = jax.block_until_ready(fwd(x, params))

    ref = postgcn_reference(x, params)
    assert out.shape == (B, N, H)
    err = jnp.max(jnp.abs(out - ref))
    # bf16 matmul operands with f32 accumulation -> loosened tolerance vs f32 reference.
    assert jnp.allclose(out, ref, atol=5e-2, rtol=5e-2), f"max abs err = {err}"

    print("KERNEL_OK")
</pallas_src>

<mosaic_0001>
module attributes {stable_mosaic.version = 11 : i64} {
  func.func @_postgcn_kernel(%arg0: i32, %arg1: memref<2x48x64xbf16, #tpu.memory_space<vmem>>, %arg2: memref<64x64xbf16, #tpu.memory_space<vmem>>, %arg3: memref<48x48xbf16, #tpu.memory_space<vmem>>, %arg4: memref<1x128xf32, #tpu.memory_space<vmem>>, %arg5: memref<48x128xf32, #tpu.memory_space<vmem>>, %arg6: memref<48x128xbf16, #tpu.memory_space<vmem>>) attributes {dimension_semantics = [#tpu.dimension_semantics<arbitrary>], iteration_bounds = array<i64: 1>, scalar_prefetch = 0 : i64, scratch_operands = 1 : i64, tpu.core_type = #tpu.core_type<tc>, window_params = [{pipeline_mode = #tpu.pipeline_mode<synchronous>, transform_indices = @transform_0, window_bounds = array<i64: 2, 48, 64>}, {pipeline_mode = #tpu.pipeline_mode<synchronous>, transform_indices = @transform_1, window_bounds = array<i64: 64, 64>}, {transform_indices = @transform_2, window_bounds = array<i64: 48, 48>}, {pipeline_mode = #tpu.pipeline_mode<synchronous>, transform_indices = @transform_3, window_bounds = array<i64: 1, 128>}, {transform_indices = @transform_4, window_bounds = array<i64: 48, 128>}]} {
    %c0_i32 = arith.constant 0 : i32
    %0 = arith.cmpi eq, %arg0, %c0_i32 : i32
    %1 = arith.extui %0 : i1 to i32
    %c0_i32_0 = arith.constant 0 : i32
    %2 = arith.cmpi ne, %1, %c0_i32_0 : i32
    scf.if %2 {
      %c0_8 = arith.constant 0 : index
      %c0_9 = arith.constant 0 : index
      %c0_10 = arith.constant 0 : index
      %10 = vector.load %arg1[%c0_8, %c0_9, %c0_10] : memref<2x48x64xbf16, #tpu.memory_space<vmem>>, vector<1x48x64xbf16>
      %11 = vector.shape_cast %10 : vector<1x48x64xbf16> to vector<48x64xbf16>
      %c0_11 = arith.constant 0 : index
      %c0_12 = arith.constant 0 : index
      %12 = vector.load %arg2[%c0_11, %c0_12] : memref<64x64xbf16, #tpu.memory_space<vmem>>, vector<64x64xbf16>
      %cst_13 = arith.constant dense<0.000000e+00> : vector<48x64xf32>
      %13 = tpu.matmul %11, %12, %cst_13 {dimension_numbers = #tpu.dot_dimension_numbers<[1], [0], [0], [1], [0, 0, 1, 1], [], []>} : vector<48x64xbf16>, vector<64x64xbf16>, vector<48x64xf32> -> vector<48x64xf32>
      %14 = arith.truncf %13 : vector<48x64xf32> to vector<48x64xbf16>
      %c0_14 = arith.constant 0 : index
      %c0_15 = arith.constant 0 : index
      %15 = vector.load %arg6[%c0_14, %c0_15] : memref<48x128xbf16, #tpu.memory_space<vmem>>, vector<48x64xbf16>
      tpu.vector_store %arg6[%c0_14, %c0_15], %14 {strides = array<i32>} : memref<48x128xbf16, #tpu.memory_space<vmem>>, vector<48x64xbf16>,
      %c1 = arith.constant 1 : index
      %c0_16 = arith.constant 0 : index
      %c0_17 = arith.constant 0 : index
      %16 = vector.load %arg1[%c1, %c0_16, %c0_17] : memref<2x48x64xbf16, #tpu.memory_space<vmem>>, vector<1x48x64xbf16>
      %17 = vector.shape_cast %16 : vector<1x48x64xbf16> to vector<48x64xbf16>
      %c0_18 = arith.constant 0 : index
      %c0_19 = arith.constant 0 : index
      %18 = vector.load %arg2[%c0_18, %c0_19] : memref<64x64xbf16, #tpu.memory_space<vmem>>, vector<64x64xbf16>
      %cst_20 = arith.constant dense<0.000000e+00> : vector<48x64xf32>
      %19 = tpu.matmul %17, %18, %cst_20 {dimension_numbers = #tpu.dot_dimension_numbers<[1], [0], [0], [1], [0, 0, 1, 1], [], []>} : vector<48x64xbf16>, vector<64x64xbf16>, vector<48x64xf32> -> vector<48x64xf32>
      %20 = arith.truncf %19 : vector<48x64xf32> to vector<48x64xbf16>
      %c0_21 = arith.constant 0 : index
      %c64 = arith.constant 64 : index
      %21 = vector.load %arg6[%c0_21, %c64] : memref<48x128xbf16, #tpu.memory_space<vmem>>, vector<48x64xbf16>
      tpu.vector_store %arg6[%c0_21, %c64], %20 {strides = array<i32>} : memref<48x128xbf16, #tpu.memory_space<vmem>>, vector<48x64xbf16>,
    } else {
    }
    %c0 = arith.constant 0 : index
    %c0_1 = arith.constant 0 : index
    %3 = vector.load %arg3[%c0, %c0_1] : memref<48x48xbf16, #tpu.memory_space<vmem>>, vector<48x48xbf16>
    %c0_2 = arith.constant 0 : index
    %c0_3 = arith.constant 0 : index
    %4 = vector.load %arg6[%c0_2, %c0_3] : memref<48x128xbf16, #tpu.memory_space<vmem>>, vector<48x128xbf16>
    %cst = arith.constant dense<0.000000e+00> : vector<48x128xf32>
    %5 = tpu.matmul %3, %4, %cst {dimension_numbers = #tpu.dot_dimension_numbers<[1], [0], [0], [1], [0, 0, 1, 1], [], []>} : vector<48x48xbf16>, vector<48x128xbf16>, vector<48x128xf32> -> vector<48x128xf32>
    %c0_4 = arith.constant 0 : index
    %c0_5 = arith.constant 0 : index
    %6 = vector.load %arg4[%c0_4, %c0_5] : memref<1x128xf32, #tpu.memory_space<vmem>>, vector<1x128xf32>
    %7 = vector.broadcast %6 : vector<1x128xf32> to vector<48x128xf32>
    %8 = arith.addf %5, %7 : vector<48x128xf32>
    %c0_6 = arith.constant 0 : index
    %c0_7 = arith.constant 0 : index
    %9 = vector.load %arg5[%c0_6, %c0_7] : memref<48x128xf32, #tpu.memory_space<vmem>>, vector<48x128xf32>
    tpu.vector_store %arg5[%c0_6, %c0_7], %8 {strides = array<i32>} : memref<48x128xf32, #tpu.memory_space<vmem>>, vector<48x128xf32>,
    return
  }
  func.func @transform_0(%arg0: i32) -> (i32, i32, i32) {
    %c0_i32 = arith.constant 0 : i32
    %c0_i32_0 = arith.constant 0 : i32
    %c0_i32_1 = arith.constant 0 : i32
    %c0_i32_2 = arith.constant 0 : i32
    return %c0_i32, %c0_i32_0, %c0_i32_1 : i32, i32, i32
  }
  func.func @transform_1(%arg0: i32) -> (i32, i32) {
    %c0_i32 = arith.constant 0 : i32
    %c0_i32_0 = arith.constant 0 : i32
    %c0_i32_1 = arith.constant 0 : i32
    return %c0_i32, %c0_i32_0 : i32, i32
  }
  func.func @transform_2(%arg0: i32) -> (i32, i32) {
    %c0_i32 = arith.constant 0 : i32
    %c0_i32_0 = arith.constant 0 : i32
    return %arg0, %c0_i32 : i32, i32
  }
  func.func @transform_3(%arg0: i32) -> (i32, i32) {
    %c0_i32 = arith.constant 0 : i32
    %c0_i32_0 = arith.constant 0 : i32
    %c0_i32_1 = arith.constant 0 : i32
    return %c0_i32, %c0_i32_0 : i32, i32
  }
  func.func @transform_4(%arg0: i32) -> (i32, i32) {
    %c0_i32 = arith.constant 0 : i32
    %c0_i32_0 = arith.constant 0 : i32
    return %arg0, %c0_i32 : i32, i32
  }
}

</mosaic_0001>

<llo_original>
// kernel: postgcn_forward.1
$region0: #{postgcn_forward.1}
  #allocation0 [shape = 'u32[]', space=smem, size = 0x4, offset = 0x4, fixed_abs, tag = 'smem constant byte address 0x4 - core index']
  #allocation1 [shape = 'u32[72,128]{1,0:T(1,128)}', space=vmem, size = 0x9000, scoped, tag = 'internal scratch']
  #allocation2 [shape = 'bf16[48,128]{1,0:T(8,128)(2,1)}', space=vmem, size = 0x3000, scoped, tag = 'scratch operand']
  %s0 = inlined_call_operand.vmem [shape: bf16[2,48,64], index: 0, kind: input, shape index: {}]
  %s1 = inlined_call_operand.vmem [shape: bf16[64,64], index: 1, kind: input, shape index: {}]
  %s2 = inlined_call_operand.vmem [shape: bf16[48,48], index: 2, kind: input, shape index: {}]
  %s3 = inlined_call_operand.vmem [shape: f32[1,128], index: 3, kind: input, shape index: {}]
  %s4 = inlined_call_operand.vmem [shape: f32[48,128], index: 4, kind: output, shape index: {}]
  %s5 = sld [smem:[#allocation0]]
  $region30: #{postgcn_forward.1} parent=0
    _
  %s7 = ssub.s32 1, %s5
  %s8 = scalar_select 0, %s7, %s5
  // Predicated region
  $region2: #{postgcn_forward.1} parent=0 // pred_check
    _
  $region3: #{postgcn_forward.1} parent=0 // pred_check_branch
    %10 = sbr.rel (0) target = $region5
  $region4: #{postgcn_forward.1} parent=0 // pred_region
    _
  $region5: #{postgcn_forward.1} parent=0 // pred_fallthru
    _
  // Predicated region
  $region6: #{postgcn_forward.1} parent=0 // pred_check
    _
  $region7: #{postgcn_forward.1} parent=0 // pred_check_branch
    %12 = sbr.rel (0) target = $region9
  $region8: #{postgcn_forward.1} parent=0 // pred_region
    _
  $region9: #{postgcn_forward.1} parent=0 // pred_fallthru
    _
  // Predicated region
  $region10: #{postgcn_forward.1} parent=0 // pred_check
    _
  $region11: #{postgcn_forward.1} parent=0 // pred_check_branch
    %14 = sbr.rel (0) target = $region13
  $region12: #{postgcn_forward.1} parent=0 // pred_region
    _
  $region13: #{postgcn_forward.1} parent=0 // pred_fallthru
    _
  // Predicated region
  $region14: #{postgcn_forward.1} parent=0 // pred_check
    _
  $region15: #{postgcn_forward.1} parent=0 // pred_check_branch
    %16 = sbr.rel (0) target = $region17
  $region16: #{postgcn_forward.1} parent=0 // pred_region
    _
  $region17: #{postgcn_forward.1} parent=0 // pred_fallthru
    _
  %p18 = scmp.eq.s32.totalorder 0, 0
  // Predicated region
  $region18: #{postgcn_forward.1} parent=0 // pred_check
    %p19 = pneg %p18
  $region19: #{postgcn_forward.1} parent=0 // pred_check_branch
    %21 = sbr.rel (%p19) target = $region21
  $region20: #{postgcn_forward.1} parent=0 // pred_region
    %v22 = vld [vmem:[%s0] sm:$0xf]
    %v23 = vld [vmem:[%s0 + $0x4] sm:$0xf]
    %v24 = vld [vmem:[%s0 + $0x8] sm:$0xf]
    %v25 = vld [vmem:[%s0 + $0xc] sm:$0xf]
    %v26 = vld [vmem:[%s0 + $0x10] sm:$0xf]
    %v27 = vld [vmem:[%s0 + $0x14] sm:$0xf]
    %v28 = vld [vmem:[%s1] sm:$0xf]
    %v29 = vld [vmem:[%s1 + $0x4] sm:$0xf]
    %v30 = vld [vmem:[%s1 + $0x8] sm:$0xf]
    %v31 = vld [vmem:[%s1 + $0xc] sm:$0xf]
    %v32 = vld [vmem:[%s1 + $0x10] sm:$0xf]
    %v33 = vld [vmem:[%s1 + $0x14] sm:$0xf]
    %v34 = vld [vmem:[%s1 + $0x18] sm:$0xf]
    %v35 = vld [vmem:[%s1 + $0x1c] sm:$0xf]
    %v42 = vunpack.c.l.b16 %v22
    %v43 = vunpack.c.l.b16 %v23
    %v44 = vunpack.c.l.b16 %v24
    %v45 = vunpack.c.l.b16 %v25
    %v46 = vunpack.c.l.b16 %v26
    %v47 = vunpack.c.l.b16 %v27
    %v48 = vpack.c.b16 %v43, %v42
    %v49 = vpack.c.b16 %v45, %v44
    %v50 = vpack.c.b16 %v47, %v46
    %v59 = vunpack.c.l.b16 %v28
    %v60 = vunpack.c.l.b16 %v29
    %v61 = vunpack.c.l.b16 %v30
    %v62 = vunpack.c.l.b16 %v31
    %v63 = vunpack.c.l.b16 %v32
    %v64 = vunpack.c.l.b16 %v33
    %v65 = vunpack.c.l.b16 %v34
    %v66 = vunpack.c.l.b16 %v35
    %v67 = vpack.c.b16 %v60, %v59
    %v68 = vpack.c.b16 %v62, %v61
    %v69 = vpack.c.b16 %v64, %v63
    %v70 = vpack.c.b16 %v66, %v65
    %vm75 = vcmask 523264
    %v77 = vsel %vm75, %v48, 0
    %v80 = vsel %vm75, %v49, 0
    %v83 = vsel %vm75, %v50, 0
    %85 = vmatpush.bf16.msra.mxu0 0
    %86 = vmatpush.bf16.msra.mxu0 0
    %87 = vmatpush.bf16.msra.mxu0 0
    %88 = vmatpush.bf16.msra.mxu0 0
    %89 = vmatpush.bf16.msra.mxu0 %v70
    %90 = vmatpush.bf16.msra.mxu0 %v69
    %91 = vmatpush.bf16.msra.mxu0 %v68
    %92 = vmatpush.bf16.msra.mxu0 %v67
    %93 = vmatmul.bf16.gmra.mxu0 %v77
    %v94 = vpop.f32.mrf.mxu0
    %v95 = vadd.f32 0.0, %v94
    %v96 = vpop.f32.mrf.mxu0
    %v97 = vadd.f32 0.0, %v96
    %98 = vmatmul.bf16.gmra.mxu0 %v80
    %v99 = vpop.f32.mrf.mxu0
    %v100 = vadd.f32 0.0, %v99
    %v101 = vpop.f32.mrf.mxu0
    %v102 = vadd.f32 0.0, %v101
    %103 = vmatmul.bf16.gmra.mxu0 %v83
    %v104 = vpop.f32.mrf.mxu0
    %v105 = vadd.f32 0.0, %v104
    %v106 = vpop.f32.mrf.mxu0
    %v107 = vadd.f32 0.0, %v106
    %108 = vdwg.mxu0
    %v109 = vpack.c.bf16 %v95, %v95
    %v110 = vpack.c.bf16 %v97, %v97
    %v111 = vpack.c.bf16 %v100, %v100
    %v112 = vpack.c.bf16 %v102, %v102
    %v113 = vpack.c.bf16 %v105, %v105
    %v114 = vpack.c.bf16 %v107, %v107
    %vm115 = vcmask 519168
    %116 = vst.msk [vmem:[#allocation2] sm:$0xf] %vm115, %v109
    %117 = vst.msk [vmem:[#allocation2 + $0x4] sm:$0xf] %vm115, %v110
    %118 = vst.msk [vmem:[#allocation2 + $0x8] sm:$0xf] %vm115, %v111
    %119 = vst.msk [vmem:[#allocation2 + $0xc] sm:$0xf] %vm115, %v112
    %120 = vst.msk [vmem:[#allocation2 + $0x10] sm:$0xf] %vm115, %v113
    %121 = vst.msk [vmem:[#allocation2 + $0x14] sm:$0xf] %vm115, %v114
    %s122 = scalar_lea.vmem %s0, 24
    %v123 = vld [vmem:[%s122] sm:$0xf]
    %v124 = vld [vmem:[%s122 + $0x4] sm:$0xf]
    %v125 = vld [vmem:[%s122 + $0x8] sm:$0xf]
    %v126 = vld [vmem:[%s122 + $0xc] sm:$0xf]
    %v127 = vld [vmem:[%s122 + $0x10] sm:$0xf]
    %v128 = vld [vmem:[%s122 + $0x14] sm:$0xf]
    %v129 = vld [vmem:[%s1] sm:$0xf]
    %v130 = vld [vmem:[%s1 + $0x4] sm:$0xf]
    %v131 = vld [vmem:[%s1 + $0x8] sm:$0xf]
    %v132 = vld [vmem:[%s1 + $0xc] sm:$0xf]
    %v133 = vld [vmem:[%s1 + $0x10] sm:$0xf]
    %v134 = vld [vmem:[%s1 + $0x14] sm:$0xf]
    %v135 = vld [vmem:[%s1 + $0x18] sm:$0xf]
    %v136 = vld [vmem:[%s1 + $0x1c] sm:$0xf]
    %v143 = vunpack.c.l.b16 %v123
    %v144 = vunpack.c.l.b16 %v124
    %v145 = vunpack.c.l.b16 %v125
    %v146 = vunpack.c.l.b16 %v126
    %v147 = vunpack.c.l.b16 %v127
    %v148 = vunpack.c.l.b16 %v128
    %v149 = vpack.c.b16 %v144, %v143
    %v150 = vpack.c.b16 %v146, %v145
    %v151 = vpack.c.b16 %v148, %v147
    %v160 = vunpack.c.l.b16 %v129
    %v161 = vunpack.c.l.b16 %v130
    %v162 = vunpack.c.l.b16 %v131
    %v163 = vunpack.c.l.b16 %v132
    %v164 = vunpack.c.l.b16 %v133
    %v165 = vunpack.c.l.b16 %v134
    %v166 = vunpack.c.l.b16 %v135
    %v167 = vunpack.c.l.b16 %v136
    %v168 = vpack.c.b16 %v161, %v160
    %v169 = vpack.c.b16 %v163, %v162
    %v170 = vpack.c.b16 %v165, %v164
    %v171 = vpack.c.b16 %v167, %v166
    %v177 = vsel %vm75, %v149, 0
    %v180 = vsel %vm75, %v150, 0
    %v183 = vsel %vm75, %v151, 0
    %185 = vmatpush.bf16.msra.mxu0 0
    %186 = vmatpush.bf16.msra.mxu0 0
    %187 = vmatpush.bf16.msra.mxu0 0
    %188 = vmatpush.bf16.msra.mxu0 0
    %189 = vmatpush.bf16.msra.mxu0 %v171
    %190 = vmatpush.bf16.msra.mxu0 %v170
    %191 = vmatpush.bf16.msra.mxu0 %v169
    %192 = vmatpush.bf16.msra.mxu0 %v168
    %193 = vmatmul.bf16.gmra.mxu0 %v177
    %v194 = vpop.f32.mrf.mxu0
    %v195 = vadd.f32 0.0, %v194
    %v196 = vpop.f32.mrf.mxu0
    %v197 = vadd.f32 0.0, %v196
    %198 = vmatmul.bf16.gmra.mxu0 %v180
    %v199 = vpop.f32.mrf.mxu0
    %v200 = vadd.f32 0.0, %v199
    %v201 = vpop.f32.mrf.mxu0
    %v202 = vadd.f32 0.0, %v201
    %203 = vmatmul.bf16.gmra.mxu0 %v183
    %v204 = vpop.f32.mrf.mxu0
    %v205 = vadd.f32 0.0, %v204
    %v206 = vpop.f32.mrf.mxu0
    %v207 = vadd.f32 0.0, %v206
    %208 = vdwg.mxu0
    %v209 = vpack.c.bf16 %v195, %v195
    %v210 = vpack.c.bf16 %v197, %v197
    %v211 = vpack.c.bf16 %v200, %v200
    %v212 = vpack.c.bf16 %v202, %v202
    %v213 = vpack.c.bf16 %v205, %v205
    %v214 = vpack.c.bf16 %v207, %v207
    %221 = vrot.lane.b32.xlu0 %v209, 64
    %v222 = vpop.permute.xlu0 %221
    %223 = vrot.lane.b32.xlu0 %v210, 64
    %v224 = vpop.permute.xlu0 %223
    %225 = vrot.lane.b32.xlu0 %v211, 64
    %v226 = vpop.permute.xlu0 %225
    %227 = vrot.lane.b32.xlu0 %v212, 64
    %v228 = vpop.permute.xlu0 %227
    %229 = vrot.lane.b32.xlu0 %v213, 64
    %v230 = vpop.permute.xlu0 %229
    %231 = vrot.lane.b32.xlu0 %v214, 64
    %v232 = vpop.permute.xlu0 %231
    %vm239 = vcmask 1043968
    %240 = vst.msk [vmem:[#allocation2] sm:$0xf] %vm239, %v222
    %241 = vst.msk [vmem:[#allocation2 + $0x4] sm:$0xf] %vm239, %v224
    %242 = vst.msk [vmem:[#allocation2 + $0x8] sm:$0xf] %vm239, %v226
    %243 = vst.msk [vmem:[#allocation2 + $0xc] sm:$0xf] %vm239, %v228
    %244 = vst.msk [vmem:[#allocation2 + $0x10] sm:$0xf] %vm239, %v230
    %245 = vst.msk [vmem:[#allocation2 + $0x14] sm:$0xf] %vm239, %v232
  $region21: #{postgcn_forward.1} parent=0 // pred_fallthru
    _
  %v246 = vld [vmem:[%s2] sm:$0xf]
  %v247 = vld [vmem:[%s2 + $0x4] sm:$0xf]
  %v248 = vld [vmem:[%s2 + $0x8] sm:$0xf]
  %v249 = vld [vmem:[%s2 + $0xc] sm:$0xf]
  %v250 = vld [vmem:[%s2 + $0x10] sm:$0xf]
  %v251 = vld [vmem:[%s2 + $0x14] sm:$0xf]
  %v252 = vld [vmem:[#allocation2] sm:$0xf]
  %v253 = vld [vmem:[#allocation2 + $0x4] sm:$0xf]
  %v254 = vld [vmem:[#allocation2 + $0x8] sm:$0xf]
  %v255 = vld [vmem:[#allocation2 + $0xc] sm:$0xf]
  %v256 = vld [vmem:[#allocation2 + $0x10] sm:$0xf]
  %v257 = vld [vmem:[#allocation2 + $0x14] sm:$0xf]
  %v258 = vld [vmem:[%s3] sm:$0x1]
  %v260 = vperm.slane %v258, 0
  %v268 = vunpack.c.l.b16 %v246
  %v269 = vunpack.c.l.b16 %v247
  %v270 = vunpack.c.l.b16 %v248
  %v271 = vunpack.c.l.b16 %v249
  %v272 = vunpack.c.l.b16 %v250
  %v273 = vunpack.c.l.b16 %v251
  %v274 = vpack.c.b16 %v269, %v268
  %v275 = vpack.c.b16 %v271, %v270
  %v276 = vpack.c.b16 %v273, %v272
  %v283 = vunpack.c.l.b16 %v252
  %v284 = vunpack.c.l.b16 %v253
  %v285 = vunpack.c.l.b16 %v254
  %v286 = vunpack.c.l.b16 %v255
  %v287 = vunpack.c.l.b16 %v256
  %v288 = vunpack.c.l.b16 %v257
  %v289 = vpack.c.b16 %v284, %v283
  %v290 = vpack.c.b16 %v286, %v285
  %v291 = vpack.c.b16 %v288, %v287
  %vm295 = vcmask 392192
  %v297 = vsel %vm295, %v274, 0
  %v300 = vsel %vm295, %v275, 0
  %v303 = vsel %vm295, %v276, 0
  %305 = vmatpush.bf16.msra.mxu0 0
  %306 = vmatpush.bf16.msra.mxu0 0
  %307 = vmatpush.bf16.msra.mxu0 0
  %308 = vmatpush.bf16.msra.mxu0 0
  %309 = vmatpush.bf16.msra.mxu0 0
  %310 = vmatpush.bf16.msra.mxu0 %v291
  %311 = vmatpush.bf16.msra.mxu0 %v290
  %312 = vmatpush.bf16.msra.mxu0 %v289
  %313 = vmatmul.bf16.gmra.mxu0 %v297
  %v314 = vpop.f32.mrf.mxu0
  %v315 = vadd.f32 %v260, %v314
  %v316 = vpop.f32.mrf.mxu0
  %v317 = vadd.f32 %v260, %v316
  %318 = vmatmul.bf16.gmra.mxu0 %v300
  %v319 = vpop.f32.mrf.mxu0
  %v320 = vadd.f32 %v260, %v319
  %v321 = vpop.f32.mrf.mxu0
  %v322 = vadd.f32 %v260, %v321
  %323 = vmatmul.bf16.gmra.mxu0 %v303
  %v324 = vpop.f32.mrf.mxu0
  %v325 = vadd.f32 %v260, %v324
  %v326 = vpop.f32.mrf.mxu0
  %v327 = vadd.f32 %v260, %v326
  %328 = vdwg.mxu0
  %329 = vst [vmem:[%s4] sm:$0xff] %v315
  %330 = vst [vmem:[%s4 + $0x8] sm:$0xff] %v317
  %331 = vst [vmem:[%s4 + $0x10] sm:$0xff] %v320
  %332 = vst [vmem:[%s4 + $0x18] sm:$0xff] %v322
  %333 = vst [vmem:[%s4 + $0x20] sm:$0xff] %v325
  %334 = vst [vmem:[%s4 + $0x28] sm:$0xff] %v327
  // Predicated region
  $region22: #{postgcn_forward.1} parent=0 // pred_check
    _
  $region23: #{postgcn_forward.1} parent=0 // pred_check_branch
    %336 = sbr.rel (0) target = $region25
  $region24: #{postgcn_forward.1} parent=0 // pred_region
    _
  $region25: #{postgcn_forward.1} parent=0 // pred_fallthru
    _
  // Predicated region
  $region26: #{postgcn_forward.1} parent=0 // pred_check
    _
  $region27: #{postgcn_forward.1} parent=0 // pred_check_branch
    %338 = sbr.rel (0) target = $region29
  $region28: #{postgcn_forward.1} parent=0 // pred_region
    _
  $region29: #{postgcn_forward.1} parent=0 // pred_fallthru
    _

</llo_original>
